<compile_context>
chip_gen: v5e
topology: v5e:2x2
jax: 0.10.0
libtpu: 0.0.40
codegen_flags: <defaults>
</compile_context>

<pallas_src>
import functools

import jax
import jax.numpy as jnp
from jax.experimental import pallas as pl
from jax.experimental.pallas import tpu as pltpu

NEG_INF = -9.0e15   # matches the -9e15 constant in _prepare_attentions


def _leaky_relu(x, alpha):
    return jnp.where(x >= 0, x, alpha * x)


def _elu(x):
    return jnp.where(x > 0, x, jnp.exp(x) - 1.0)


def _masked_softmax(e, adj):
    """_prepare_attentions + softmax over genes: mask by adjacency, scale by
    adjacency values, softmax along the last axis.  Normalization goes through
    the EUP approximate reciprocal + one Newton step (f32 accurate)."""
    att = jnp.where(adj != 0, e * adj, NEG_INF)
    m = jnp.max(att, axis=2, keepdims=True)
    p = jnp.exp(att - m)
    s = jnp.sum(p, axis=2, keepdims=True)
    inv = pl.reciprocal(s, approx=True)
    inv = inv * (2.0 - s * inv)          # one NR step
    return p * inv


def gat_kernel(feaT_ref, adj_ref, w_all_ref, last_w_ref, out_ref, *,
               nhead, n_hidden, en_dim, alpha):
    TB, D, N = feaT_ref.shape
    R = adj_ref.shape[1]
    Hnh = nhead * n_hidden
    W = w_all_ref.shape[0]               # Hnh + 2*nhead (folded score rows)
    E_pad = last_w_ref.shape[1]
    f32 = jnp.float32
    cdt = w_all_ref.dtype                 # MXU compute dtype (bf16 or f32)

    # ---- fused projection: per-sample (W, D) @ (D, N), genes on lanes ------
    # Rows 0..Hnh-1 are the stacked head weights, rows Hnh..Hnh+nhead-1 the
    # folded W_h@a1_h projections, rows Hnh+nhead.. the folded W_h@a2_h.
    # TODO(synk): F.dropout on the input features is identity in eval mode.
    w_b = jnp.broadcast_to(w_all_ref[...], (TB, W, D))       # hoisted, tiny
    projT = jnp.einsum('bwd,bdn->bwn', w_b, feaT_ref[...],
                       preferred_element_type=f32)           # (TB, W, N) f32

    adj = adj_ref[...]                                       # (TB, R, N) f32

    # Per-regulon scores need R on sublanes -> one tiny lane->sublane move.
    s1_all = jnp.swapaxes(projT[:, Hnh:Hnh + nhead, :R], 1, 2)   # (TB, R, nhead)
    s2_all = projT[:, Hnh + nhead:Hnh + 2 * nhead, :]            # (TB, nhead, N)

    hidden_parts = []
    for h in range(nhead):
        e = _leaky_relu(s1_all[:, :, h:h + 1] + s2_all[:, h:h + 1, :], alpha)
        att = _masked_softmax(e, adj)                        # (TB, R, N) f32
        # TODO(synk): F.dropout on the attention weights is identity in eval mode.
        whT = projT[:, h * n_hidden:(h + 1) * n_hidden, :]   # (TB, nh, N)
        res = jnp.einsum('brn,bdn->brd',
                         att.astype(cdt), whT.astype(cdt),
                         preferred_element_type=f32)         # (TB, R, nh)
        hidden_parts.append(_elu(res))
    # Single lane-concat in registers (no per-head masked stores, no scratch).
    hidden = jnp.concatenate(hidden_parts, axis=-1)          # (TB, R, Hnh)

    # ---- final Graph_Attention_Layer (concat=False) on adj[:, :, :R] --------
    # Columns 0..en_dim-1 of last_w are the real weight, column en_dim is the
    # folded last_w@a1, column en_dim+1 the folded last_w@a2 (inside padding).
    wh_last = jnp.einsum('brk,ke->bre',
                         hidden.astype(cdt), last_w_ref[...],
                         preferred_element_type=f32)          # (TB, R, E_pad)
    s1_l = wh_last[:, :, en_dim:en_dim + 1]                   # (TB, R, 1)
    s2_l = jnp.swapaxes(wh_last[:, :, en_dim + 1:en_dim + 2], 1, 2)  # (TB, 1, R)
    e_l = _leaky_relu(s1_l + s2_l, alpha)                     # (TB, R, R)
    att_l = _masked_softmax(e_l, adj[:, :, :R])               # slice, no 2nd DMA
    res_l = jnp.einsum('brq,bqe->bre',
                       att_l.astype(cdt), wh_last.astype(cdt),
                       preferred_element_type=f32)            # (TB, R, E_pad)
    # Lanes >= en_dim carry padded/score garbage; the wrapper slices them off.
    out_ref[...] = _elu(res_l).astype(out_ref.dtype)


# --------------------------- wrapper / host prep -----------------------------
def _ceil_to(x, m):
    return ((x + m - 1) // m) * m


def _vmem_capacity_bytes():
    try:
        info = pltpu.get_tpu_info()
        cap = getattr(info, "vmem_capacity_bytes", None)
        if cap:
            return int(cap)
    except Exception:
        pass
    return 64 << 20     # conservative (v7x-sized) fallback


def _step_vmem_bytes(tb, D, N, R, W, Hnh, E_pad, mxu_bytes):
    """Rough per-grid-step VMEM footprint (double-buffered I/O + temporaries)."""
    Nl = _ceil_to(N, 128)
    fea = tb * _ceil_to(D, 8) * Nl * mxu_bytes
    adj = tb * _ceil_to(R, 8) * Nl * 4
    out = tb * _ceil_to(R, 8) * E_pad * 4
    wgt = (_ceil_to(W, 8) * _ceil_to(D, 128)
           + _ceil_to(Hnh, 8) * E_pad) * mxu_bytes
    proj = tb * _ceil_to(W, 8) * Nl * 4
    tmp = 4 * tb * _ceil_to(R, 8) * Nl * 4      # e / exp / att live values
    return 2 * (fea + adj + out + wgt) + proj + tmp


def _pick_batch_tile(B, vmem_capacity, step_bytes):
    budget = int(0.70 * vmem_capacity)
    divs = [d for d in range(1, B + 1) if B % d == 0]
    fits = [d for d in divs if step_bytes(d) <= budget] or [1]
    if vmem_capacity <= (96 << 20):
        # v7x-class (64 MiB VMEM, 2 TensorCores): prefer an even step count so
        # the "parallel" batch axis shards evenly across both cores.
        even = [d for d in fits if (B // d) % 2 == 0]
        if even:
            return max(even)
    # v5e / v6e: single TensorCore -> fewest grid steps (largest fitting TB).
    return max(fits)


def gat_forward(fea_mats, adj_mats, heads_w, heads_a, last_w, last_a, *,
                n_hidden, en_dim, alpha=0.2, mxu_dtype=jnp.bfloat16,
                batch_tile=None):
    B, N, D = fea_mats.shape
    _, R, _ = adj_mats.shape
    nhead = heads_w.shape[0]
    Hnh = nhead * n_hidden
    W = Hnh + 2 * nhead
    f32 = jnp.float32

    # Fold the per-head a1/a2 projections into the transposed projection weight
    # (extra rows, which cost nothing inside the 128-lane-padded block).  The
    # folds are built from the MXU-dtype-rounded weights so the fused path
    # matches the unfused (x@W)@a computation at the same precision.
    hw = heads_w.astype(mxu_dtype).astype(f32)               # (nhead, D, nh)
    a1 = heads_a[:, :n_hidden, 0].astype(f32)                # (nhead, nh)
    a2 = heads_a[:, n_hidden:, 0].astype(f32)                # (nhead, nh)
    w_stack_T = jnp.transpose(hw, (0, 2, 1)).reshape(Hnh, D)  # rows h*nh+d
    wa1_T = jnp.einsum('hij,hj->hi', hw, a1)                 # (nhead, D)
    wa2_T = jnp.einsum('hij,hj->hi', hw, a2)                 # (nhead, D)
    w_all_T = jnp.concatenate([w_stack_T, wa1_T, wa2_T], axis=0)   # (W, D)

    # Last-layer weight, lane-dense (E_pad multiple of 128) with the two folded
    # score columns tucked into the padding at [en_dim] / [en_dim + 1].
    E_pad = _ceil_to(en_dim + 2, 128)
    lw = last_w.astype(mxu_dtype).astype(f32)                # (Hnh, en_dim)
    la1 = last_a[:en_dim, 0].astype(f32)
    la2 = last_a[en_dim:, 0].astype(f32)
    last_w_ext = jnp.zeros((Hnh, E_pad), f32)
    last_w_ext = last_w_ext.at[:, :en_dim].set(lw)
    last_w_ext = last_w_ext.at[:, en_dim].set(lw @ la1)
    last_w_ext = last_w_ext.at[:, en_dim + 1].set(lw @ la2)

    # Genes on lanes: (B, N, D) -> (B, D, N).
    feaT = jnp.transpose(fea_mats, (0, 2, 1))

    vmem_cap = _vmem_capacity_bytes()
    mxu_bytes = jnp.dtype(mxu_dtype).itemsize
    step_fn = lambda tb: _step_vmem_bytes(tb, D, N, R, W, Hnh, E_pad, mxu_bytes)
    TB = batch_tile if batch_tile is not None else _pick_batch_tile(
        B, vmem_cap, step_fn)
    assert B % TB == 0, "batch must be divisible by the batch tile"
    vmem_limit = max(32 << 20, min(int(0.80 * vmem_cap), 100 << 20))

    kernel = functools.partial(gat_kernel, nhead=nhead, n_hidden=n_hidden,
                               en_dim=en_dim, alpha=alpha)
    # TODO(synk): for production gene counts (N in the many thousands) the gene
    # axis should additionally be tiled with an online softmax (flash-style);
    # unnecessary at these shapes.
    out = pl.pallas_call(
        kernel,
        out_shape=jax.ShapeDtypeStruct((B, R, E_pad), f32),
        grid=(B // TB,),
        in_specs=[
            pl.BlockSpec((TB, D, N), lambda b: (b, 0, 0)),
            pl.BlockSpec((TB, R, N), lambda b: (b, 0, 0)),
            pl.BlockSpec((W, D), lambda b: (0, 0)),
            pl.BlockSpec((Hnh, E_pad), lambda b: (0, 0)),
        ],
        out_specs=pl.BlockSpec((TB, R, E_pad), lambda b: (b, 0, 0)),
        compiler_params=pltpu.CompilerParams(
            dimension_semantics=("parallel",),
            vmem_limit_bytes=vmem_limit),
    )(feaT.astype(mxu_dtype), adj_mats.astype(f32),
      w_all_T.astype(mxu_dtype), last_w_ext.astype(mxu_dtype))
    return out[:, :, :en_dim]


# ---------- pure-JAX reference (mirrors the PyTorch code, eval mode) ----------
def _ref_layer(x, adj, W, a, out_dim, alpha, concat):
    R = adj.shape[0]
    w_h = x @ W
    w_h1 = w_h[:R, :] @ a[:out_dim, :]
    w_h2 = w_h @ a[out_dim:, :]
    pre = w_h1 + w_h2.T
    e = jnp.where(pre >= 0, pre, alpha * pre)
    att = jnp.where(adj != 0, e * adj, NEG_INF)
    att = jax.nn.softmax(att, axis=1)
    res = att @ w_h
    return jnp.where(res > 0, res, jnp.exp(res) - 1.0) if concat else res


def gat_ref(fea_mats, adj_mats, heads_w, heads_a, last_w, last_a,
            n_hidden, en_dim, alpha=0.2):
    outs = []
    for i in range(fea_mats.shape[0]):
        x, adj = fea_mats[i], adj_mats[i]
        R = adj.shape[0]
        hs = [_ref_layer(x, adj, heads_w[h], heads_a[h], n_hidden, alpha, True)
              for h in range(heads_w.shape[0])]
        xc = jnp.concatenate(hs, axis=1)
        r = _ref_layer(xc, adj[:, :R], last_w, last_a, en_dim, alpha, False)
        outs.append(jnp.where(r > 0, r, jnp.exp(r) - 1.0))
    return jnp.stack(outs, 0)


def _xavier_uniform(key, shape, gain=1.414):
    fan_in, fan_out = shape[-2], shape[-1]
    bound = gain * (6.0 / (fan_in + fan_out)) ** 0.5
    return jax.random.uniform(key, shape, jnp.float32, -bound, bound)


if __name__ == "__main__":
    B, N, R = 2, 16, 8        # batch, genes, regulons
    D = 4                     # input features per gene (d_model)
    nhead, n_hidden, en_dim = 2, 8, 2
    alpha = 0.2

    key = jax.random.PRNGKey(0)
    k_fea, k_adjv, k_adjm, k_hw, k_ha, k_lw, k_la = jax.random.split(key, 7)

    fea_mats = jax.random.normal(k_fea, (B, N, D), jnp.float32)
    adj_vals = jax.random.uniform(k_adjv, (B, R, N), jnp.float32, -1.0, 1.0)
    adj_mask = jax.random.uniform(k_adjm, (B, R, N)) < 0.5
    adj_mats = jnp.where(adj_mask, adj_vals, 0.0)

    heads_w = _xavier_uniform(k_hw, (nhead, D, n_hidden))
    heads_a = _xavier_uniform(k_ha, (nhead, 2 * n_hidden, 1))
    last_w = _xavier_uniform(k_lw, (nhead * n_hidden, en_dim))
    last_a = _xavier_uniform(k_la, (2 * en_dim, 1))

    ref = gat_ref(fea_mats, adj_mats, heads_w, heads_a, last_w, last_a,
                  n_hidden, en_dim, alpha)

    # 1) Exact-semantics check: f32 MXU path vs the pure-f32 reference.
    out_f32 = jax.block_until_ready(
        gat_forward(fea_mats, adj_mats, heads_w, heads_a, last_w, last_a,
                    n_hidden=n_hidden, en_dim=en_dim, alpha=alpha,
                    mxu_dtype=jnp.float32))
    assert out_f32.shape == (B, R, en_dim)
    assert jnp.allclose(out_f32, ref, atol=1e-3, rtol=1e-3), "f32 mismatch"

    # 2) Production perf path (default): bf16 MXU inputs per the perf review,
    #    checked against a precision-matched reference (same weights/features
    #    rounded through bf16, rest of the math in f32).
    out_bf16 = jax.block_until_ready(
        gat_forward(fea_mats, adj_mats, heads_w, heads_a, last_w, last_a,
                    n_hidden=n_hidden, en_dim=en_dim, alpha=alpha))
    rnd = lambda x: x.astype(jnp.bfloat16).astype(jnp.float32)
    ref_bf = gat_ref(rnd(fea_mats), adj_mats, rnd(heads_w), heads_a,
                     rnd(last_w), last_a, n_hidden, en_dim, alpha)
    assert out_bf16.shape == (B, R, en_dim)
    assert jnp.allclose(out_bf16, ref_bf, atol=5e-2, rtol=5e-2), "bf16 mismatch"

    print("KERNEL_OK")
</pallas_src>

<mosaic_0001>
module attributes {stable_mosaic.version = 11 : i64} {
  func.func @gat_kernel(%arg0: i32, %arg1: memref<1x4x16xf32, #tpu.memory_space<vmem>>, %arg2: memref<1x8x16xf32, #tpu.memory_space<vmem>>, %arg3: memref<20x4xf32, #tpu.memory_space<vmem>>, %arg4: memref<16x128xf32, #tpu.memory_space<vmem>>, %arg5: memref<1x8x128xf32, #tpu.memory_space<vmem>>) attributes {dimension_semantics = [#tpu.dimension_semantics<parallel>], iteration_bounds = array<i64: 2>, scalar_prefetch = 0 : i64, scratch_operands = 0 : i64, tpu.core_type = #tpu.core_type<tc>, window_params = [{transform_indices = @transform_0, window_bounds = array<i64: 1, 4, 16>}, {transform_indices = @transform_1, window_bounds = array<i64: 1, 8, 16>}, {pipeline_mode = #tpu.pipeline_mode<synchronous>, transform_indices = @transform_2, window_bounds = array<i64: 20, 4>}, {pipeline_mode = #tpu.pipeline_mode<synchronous>, transform_indices = @transform_3, window_bounds = array<i64: 16, 128>}, {transform_indices = @transform_4, window_bounds = array<i64: 1, 8, 128>}]} {
    %c0 = arith.constant 0 : index
    %c0_0 = arith.constant 0 : index
    %0 = vector.load %arg3[%c0, %c0_0] : memref<20x4xf32, #tpu.memory_space<vmem>>, vector<20x4xf32>
    %1 = vector.shape_cast %0 : vector<20x4xf32> to vector<1x20x4xf32>
    %c0_1 = arith.constant 0 : index
    %c0_2 = arith.constant 0 : index
    %c0_3 = arith.constant 0 : index
    %2 = vector.load %arg1[%c0_1, %c0_2, %c0_3] : memref<1x4x16xf32, #tpu.memory_space<vmem>>, vector<1x4x16xf32>
    "tpu.trace_start"() <{level = 10 : i32, message = "bwd,bdn->bwn"}> : () -> ()
    %cst = arith.constant dense<0.000000e+00> : vector<1x20x16xf32>
    %3 = tpu.matmul %1, %2, %cst {dimension_numbers = #tpu.dot_dimension_numbers<[2], [1], [1], [2], [0, 0, 0, 1, 1, 2], [0], [0]>} : vector<1x20x4xf32>, vector<1x4x16xf32>, vector<1x20x16xf32> -> vector<1x20x16xf32>
    "tpu.trace_stop"() : () -> ()
    %c0_4 = arith.constant 0 : index
    %c0_5 = arith.constant 0 : index
    %c0_6 = arith.constant 0 : index
    %4 = vector.load %arg2[%c0_4, %c0_5, %c0_6] : memref<1x8x16xf32, #tpu.memory_space<vmem>>, vector<1x8x16xf32>
    %5 = vector.extract_strided_slice %3 {offsets = [0, 16, 0], sizes = [1, 2, 8], strides = [1, 1, 1]} : vector<1x20x16xf32> to vector<1x2x8xf32>
    %6 = tpu.transpose %5, [0, 2, 1] : vector<1x2x8xf32> -> vector<1x8x2xf32>
    %7 = vector.extract_strided_slice %3 {offsets = [0, 18, 0], sizes = [1, 2, 16], strides = [1, 1, 1]} : vector<1x20x16xf32> to vector<1x2x16xf32>
    %8 = vector.extract_strided_slice %6 {offsets = [0, 0, 0], sizes = [1, 8, 1], strides = [1, 1, 1]} : vector<1x8x2xf32> to vector<1x8x1xf32>
    %9 = vector.extract_strided_slice %7 {offsets = [0, 0, 0], sizes = [1, 1, 16], strides = [1, 1, 1]} : vector<1x2x16xf32> to vector<1x1x16xf32>
    %10 = vector.broadcast %8 : vector<1x8x1xf32> to vector<1x8x16xf32>
    %11 = vector.broadcast %9 : vector<1x1x16xf32> to vector<1x8x16xf32>
    %12 = arith.addf %10, %11 : vector<1x8x16xf32>
    %cst_7 = arith.constant 0.000000e+00 : f32
    %13 = vector.broadcast %cst_7 : f32 to vector<1x8x16xf32>
    %14 = arith.cmpf oge, %12, %13 : vector<1x8x16xf32>
    %cst_8 = arith.constant 2.000000e-01 : f32
    %15 = vector.broadcast %cst_8 : f32 to vector<1x8x16xf32>
    %16 = arith.mulf %15, %12 : vector<1x8x16xf32>
    %17 = arith.select %14, %12, %16 : vector<1x8x16xi1>, vector<1x8x16xf32>
    %cst_9 = arith.constant 0.000000e+00 : f32
    %18 = vector.broadcast %cst_9 : f32 to vector<1x8x16xf32>
    %19 = arith.cmpf one, %4, %18 : vector<1x8x16xf32>
    %20 = arith.mulf %17, %4 : vector<1x8x16xf32>
    %cst_10 = arith.constant -9.000000e+15 : f32
    %21 = vector.broadcast %cst_10 : f32 to vector<1x8x16xf32>
    %22 = arith.select %19, %20, %21 : vector<1x8x16xi1>, vector<1x8x16xf32>
    %cst_11 = arith.constant dense<0xFF800000> : vector<1x8xf32>
    %23 = vector.multi_reduction <maximumf>, %22, %cst_11 [2] : vector<1x8x16xf32> to vector<1x8xf32>
    %24 = vector.shape_cast %23 : vector<1x8xf32> to vector<1x8x1xf32>
    %25 = vector.broadcast %24 : vector<1x8x1xf32> to vector<1x8x16xf32>
    %26 = arith.subf %22, %25 : vector<1x8x16xf32>
    %27 = math.exp %26 : vector<1x8x16xf32>
    %cst_12 = arith.constant dense<0.000000e+00> : vector<1x8xf32>
    %28 = vector.multi_reduction <add>, %27, %cst_12 [2] : vector<1x8x16xf32> to vector<1x8xf32>
    %29 = vector.shape_cast %28 : vector<1x8xf32> to vector<1x8x1xf32>
    %30 = tpu.reciprocal %29 {approx = true} : vector<1x8x1xf32> -> vector<1x8x1xf32>
    %31 = arith.mulf %29, %30 : vector<1x8x1xf32>
    %cst_13 = arith.constant 2.000000e+00 : f32
    %32 = vector.broadcast %cst_13 : f32 to vector<1x8x1xf32>
    %33 = arith.subf %32, %31 : vector<1x8x1xf32>
    %34 = arith.mulf %30, %33 : vector<1x8x1xf32>
    %35 = vector.broadcast %34 : vector<1x8x1xf32> to vector<1x8x16xf32>
    %36 = arith.mulf %27, %35 : vector<1x8x16xf32>
    %37 = vector.extract_strided_slice %3 {offsets = [0, 0, 0], sizes = [1, 8, 16], strides = [1, 1, 1]} : vector<1x20x16xf32> to vector<1x8x16xf32>
    "tpu.trace_start"() <{level = 10 : i32, message = "brn,bdn->brd"}> : () -> ()
    %cst_14 = arith.constant dense<0.000000e+00> : vector<1x8x8xf32>
    %38 = tpu.matmul %36, %37, %cst_14 {dimension_numbers = #tpu.dot_dimension_numbers<[2], [2], [1], [1], [0, 0, 0, 1, 1, 1], [0], [0]>} : vector<1x8x16xf32>, vector<1x8x16xf32>, vector<1x8x8xf32> -> vector<1x8x8xf32>
    %cst_15 = arith.constant 0.000000e+00 : f32
    "tpu.trace_stop"() : () -> ()
    %39 = vector.broadcast %cst_15 : f32 to vector<1x8x8xf32>
    %40 = arith.cmpf ogt, %38, %39 : vector<1x8x8xf32>
    %41 = math.exp %38 : vector<1x8x8xf32>
    %cst_16 = arith.constant 1.000000e+00 : f32
    %42 = vector.broadcast %cst_16 : f32 to vector<1x8x8xf32>
    %43 = arith.subf %41, %42 : vector<1x8x8xf32>
    %44 = arith.select %40, %38, %43 : vector<1x8x8xi1>, vector<1x8x8xf32>
    %45 = vector.extract_strided_slice %6 {offsets = [0, 0, 1], sizes = [1, 8, 1], strides = [1, 1, 1]} : vector<1x8x2xf32> to vector<1x8x1xf32>
    %46 = vector.extract_strided_slice %7 {offsets = [0, 1, 0], sizes = [1, 1, 16], strides = [1, 1, 1]} : vector<1x2x16xf32> to vector<1x1x16xf32>
    %47 = vector.broadcast %45 : vector<1x8x1xf32> to vector<1x8x16xf32>
    %48 = vector.broadcast %46 : vector<1x1x16xf32> to vector<1x8x16xf32>
    %49 = arith.addf %47, %48 : vector<1x8x16xf32>
    %cst_17 = arith.constant 0.000000e+00 : f32
    %50 = vector.broadcast %cst_17 : f32 to vector<1x8x16xf32>
    %51 = arith.cmpf oge, %49, %50 : vector<1x8x16xf32>
    %cst_18 = arith.constant 2.000000e-01 : f32
    %52 = vector.broadcast %cst_18 : f32 to vector<1x8x16xf32>
    %53 = arith.mulf %52, %49 : vector<1x8x16xf32>
    %54 = arith.select %51, %49, %53 : vector<1x8x16xi1>, vector<1x8x16xf32>
    %cst_19 = arith.constant 0.000000e+00 : f32
    %55 = vector.broadcast %cst_19 : f32 to vector<1x8x16xf32>
    %56 = arith.cmpf one, %4, %55 : vector<1x8x16xf32>
    %57 = arith.mulf %54, %4 : vector<1x8x16xf32>
    %cst_20 = arith.constant -9.000000e+15 : f32
    %58 = vector.broadcast %cst_20 : f32 to vector<1x8x16xf32>
    %59 = arith.select %56, %57, %58 : vector<1x8x16xi1>, vector<1x8x16xf32>
    %cst_21 = arith.constant dense<0xFF800000> : vector<1x8xf32>
    %60 = vector.multi_reduction <maximumf>, %59, %cst_21 [2] : vector<1x8x16xf32> to vector<1x8xf32>
    %61 = vector.shape_cast %60 : vector<1x8xf32> to vector<1x8x1xf32>
    %62 = vector.broadcast %61 : vector<1x8x1xf32> to vector<1x8x16xf32>
    %63 = arith.subf %59, %62 : vector<1x8x16xf32>
    %64 = math.exp %63 : vector<1x8x16xf32>
    %cst_22 = arith.constant dense<0.000000e+00> : vector<1x8xf32>
    %65 = vector.multi_reduction <add>, %64, %cst_22 [2] : vector<1x8x16xf32> to vector<1x8xf32>
    %66 = vector.shape_cast %65 : vector<1x8xf32> to vector<1x8x1xf32>
    %67 = tpu.reciprocal %66 {approx = true} : vector<1x8x1xf32> -> vector<1x8x1xf32>
    %68 = arith.mulf %66, %67 : vector<1x8x1xf32>
    %cst_23 = arith.constant 2.000000e+00 : f32
    %69 = vector.broadcast %cst_23 : f32 to vector<1x8x1xf32>
    %70 = arith.subf %69, %68 : vector<1x8x1xf32>
    %71 = arith.mulf %67, %70 : vector<1x8x1xf32>
    %72 = vector.broadcast %71 : vector<1x8x1xf32> to vector<1x8x16xf32>
    %73 = arith.mulf %64, %72 : vector<1x8x16xf32>
    %74 = vector.extract_strided_slice %3 {offsets = [0, 8, 0], sizes = [1, 8, 16], strides = [1, 1, 1]} : vector<1x20x16xf32> to vector<1x8x16xf32>
    "tpu.trace_start"() <{level = 10 : i32, message = "brn,bdn->brd"}> : () -> ()
    %cst_24 = arith.constant dense<0.000000e+00> : vector<1x8x8xf32>
    %75 = tpu.matmul %73, %74, %cst_24 {dimension_numbers = #tpu.dot_dimension_numbers<[2], [2], [1], [1], [0, 0, 0, 1, 1, 1], [0], [0]>} : vector<1x8x16xf32>, vector<1x8x16xf32>, vector<1x8x8xf32> -> vector<1x8x8xf32>
    %cst_25 = arith.constant 0.000000e+00 : f32
    "tpu.trace_stop"() : () -> ()
    %76 = vector.broadcast %cst_25 : f32 to vector<1x8x8xf32>
    %77 = arith.cmpf ogt, %75, %76 : vector<1x8x8xf32>
    %78 = math.exp %75 : vector<1x8x8xf32>
    %cst_26 = arith.constant 1.000000e+00 : f32
    %79 = vector.broadcast %cst_26 : f32 to vector<1x8x8xf32>
    %80 = arith.subf %78, %79 : vector<1x8x8xf32>
    %81 = arith.select %77, %75, %80 : vector<1x8x8xi1>, vector<1x8x8xf32>
    %82 = tpu.concatenate %44, %81 in 2 : vector<1x8x8xf32>, vector<1x8x8xf32> -> vector<1x8x16xf32>
    %c0_27 = arith.constant 0 : index
    %c0_28 = arith.constant 0 : index
    %83 = vector.load %arg4[%c0_27, %c0_28] : memref<16x128xf32, #tpu.memory_space<vmem>>, vector<16x128xf32>
    "tpu.trace_start"() <{level = 10 : i32, message = "brk,ke->bre"}> : () -> ()
    %cst_29 = arith.constant dense<0.000000e+00> : vector<1x8x128xf32>
    %84 = tpu.matmul %82, %83, %cst_29 {dimension_numbers = #tpu.dot_dimension_numbers<[2], [0], [0, 1], [1], [0, 0, 0, 1, 1, 1], [], []>} : vector<1x8x16xf32>, vector<16x128xf32>, vector<1x8x128xf32> -> vector<1x8x128xf32>
    "tpu.trace_stop"() : () -> ()
    %85 = vector.extract_strided_slice %84 {offsets = [0, 0, 2], sizes = [1, 8, 1], strides = [1, 1, 1]} : vector<1x8x128xf32> to vector<1x8x1xf32>
    %86 = vector.extract_strided_slice %84 {offsets = [0, 0, 3], sizes = [1, 8, 1], strides = [1, 1, 1]} : vector<1x8x128xf32> to vector<1x8x1xf32>
    %87 = tpu.transpose %86, [0, 2, 1] : vector<1x8x1xf32> -> vector<1x1x8xf32>
    %88 = vector.broadcast %85 : vector<1x8x1xf32> to vector<1x8x8xf32>
    %89 = vector.broadcast %87 : vector<1x1x8xf32> to vector<1x8x8xf32>
    %90 = arith.addf %88, %89 : vector<1x8x8xf32>
    %cst_30 = arith.constant 0.000000e+00 : f32
    %91 = vector.broadcast %cst_30 : f32 to vector<1x8x8xf32>
    %92 = arith.cmpf oge, %90, %91 : vector<1x8x8xf32>
    %cst_31 = arith.constant 2.000000e-01 : f32
    %93 = vector.broadcast %cst_31 : f32 to vector<1x8x8xf32>
    %94 = arith.mulf %93, %90 : vector<1x8x8xf32>
    %95 = arith.select %92, %90, %94 : vector<1x8x8xi1>, vector<1x8x8xf32>
    %96 = vector.extract_strided_slice %4 {offsets = [0, 0, 0], sizes = [1, 8, 8], strides = [1, 1, 1]} : vector<1x8x16xf32> to vector<1x8x8xf32>
    %cst_32 = arith.constant 0.000000e+00 : f32
    %97 = vector.broadcast %cst_32 : f32 to vector<1x8x8xf32>
    %98 = arith.cmpf one, %96, %97 : vector<1x8x8xf32>
    %99 = arith.mulf %95, %96 : vector<1x8x8xf32>
    %cst_33 = arith.constant -9.000000e+15 : f32
    %100 = vector.broadcast %cst_33 : f32 to vector<1x8x8xf32>
    %101 = arith.select %98, %99, %100 : vector<1x8x8xi1>, vector<1x8x8xf32>
    %cst_34 = arith.constant dense<0xFF800000> : vector<1x8xf32>
    %102 = vector.multi_reduction <maximumf>, %101, %cst_34 [2] : vector<1x8x8xf32> to vector<1x8xf32>
    %103 = vector.shape_cast %102 : vector<1x8xf32> to vector<1x8x1xf32>
    %104 = vector.broadcast %103 : vector<1x8x1xf32> to vector<1x8x8xf32>
    %105 = arith.subf %101, %104 : vector<1x8x8xf32>
    %106 = math.exp %105 : vector<1x8x8xf32>
    %cst_35 = arith.constant dense<0.000000e+00> : vector<1x8xf32>
    %107 = vector.multi_reduction <add>, %106, %cst_35 [2] : vector<1x8x8xf32> to vector<1x8xf32>
    %108 = vector.shape_cast %107 : vector<1x8xf32> to vector<1x8x1xf32>
    %109 = tpu.reciprocal %108 {approx = true} : vector<1x8x1xf32> -> vector<1x8x1xf32>
    %110 = arith.mulf %108, %109 : vector<1x8x1xf32>
    %cst_36 = arith.constant 2.000000e+00 : f32
    %111 = vector.broadcast %cst_36 : f32 to vector<1x8x1xf32>
    %112 = arith.subf %111, %110 : vector<1x8x1xf32>
    %113 = arith.mulf %109, %112 : vector<1x8x1xf32>
    %114 = vector.broadcast %113 : vector<1x8x1xf32> to vector<1x8x8xf32>
    %115 = arith.mulf %106, %114 : vector<1x8x8xf32>
    "tpu.trace_start"() <{level = 10 : i32, message = "brq,bqe->bre"}> : () -> ()
    %cst_37 = arith.constant dense<0.000000e+00> : vector<1x8x128xf32>
    %116 = tpu.matmul %115, %84, %cst_37 {dimension_numbers = #tpu.dot_dimension_numbers<[2], [1], [1], [2], [0, 0, 0, 1, 1, 2], [0], [0]>} : vector<1x8x8xf32>, vector<1x8x128xf32>, vector<1x8x128xf32> -> vector<1x8x128xf32>
    %cst_38 = arith.constant 0.000000e+00 : f32
    "tpu.trace_stop"() : () -> ()
    %117 = vector.broadcast %cst_38 : f32 to vector<1x8x128xf32>
    %118 = arith.cmpf ogt, %116, %117 : vector<1x8x128xf32>
    %119 = math.exp %116 : vector<1x8x128xf32>
    %cst_39 = arith.constant 1.000000e+00 : f32
    %120 = vector.broadcast %cst_39 : f32 to vector<1x8x128xf32>
    %121 = arith.subf %119, %120 : vector<1x8x128xf32>
    %122 = arith.select %118, %116, %121 : vector<1x8x128xi1>, vector<1x8x128xf32>
    %c0_40 = arith.constant 0 : index
    %c0_41 = arith.constant 0 : index
    %c0_42 = arith.constant 0 : index
    %123 = vector.load %arg5[%c0_40, %c0_41, %c0_42] : memref<1x8x128xf32, #tpu.memory_space<vmem>>, vector<1x8x128xf32>
    tpu.vector_store %arg5[%c0_40, %c0_41, %c0_42], %122 {strides = array<i32>} : memref<1x8x128xf32, #tpu.memory_space<vmem>>, vector<1x8x128xf32>,
    return
  }
  func.func @transform_0(%arg0: i32) -> (i32, i32, i32) {
    %c0_i32 = arith.constant 0 : i32
    %c0_i32_0 = arith.constant 0 : i32
    %c0_i32_1 = arith.constant 0 : i32
    return %arg0, %c0_i32, %c0_i32_0 : i32, i32, i32
  }
  func.func @transform_1(%arg0: i32) -> (i32, i32, i32) {
    %c0_i32 = arith.constant 0 : i32
    %c0_i32_0 = arith.constant 0 : i32
    %c0_i32_1 = arith.constant 0 : i32
    return %arg0, %c0_i32, %c0_i32_0 : i32, i32, i32
  }
  func.func @transform_2(%arg0: i32) -> (i32, i32) {
    %c0_i32 = arith.constant 0 : i32
    %c0_i32_0 = arith.constant 0 : i32
    %c0_i32_1 = arith.constant 0 : i32
    return %c0_i32, %c0_i32_0 : i32, i32
  }
  func.func @transform_3(%arg0: i32) -> (i32, i32) {
    %c0_i32 = arith.constant 0 : i32
    %c0_i32_0 = arith.constant 0 : i32
    %c0_i32_1 = arith.constant 0 : i32
    return %c0_i32, %c0_i32_0 : i32, i32
  }
  func.func @transform_4(%arg0: i32) -> (i32, i32, i32) {
    %c0_i32 = arith.constant 0 : i32
    %c0_i32_0 = arith.constant 0 : i32
    %c0_i32_1 = arith.constant 0 : i32
    return %arg0, %c0_i32, %c0_i32_0 : i32, i32, i32
  }
}

</mosaic_0001>

<llo_original>
// kernel: tpu_custom_call.1
$region0: #{tpu_custom_call.1}
  #allocation0 [shape = 'u32[]', space=smem, size = 0x4, offset = 0x4, fixed_abs, tag = 'smem constant byte address 0x4 - core index']
  #allocation1 [shape = 'u32[72,128]{1,0:T(1,128)}', space=vmem, size = 0x9000, scoped, tag = 'internal scratch']
  %s0 = inlined_call_operand.vmem [shape: f32[2,4,16], index: 0, kind: input, shape index: {}]
  %s1 = inlined_call_operand.vmem [shape: f32[2,8,16], index: 1, kind: input, shape index: {}]
  %s2 = inlined_call_operand.vmem [shape: f32[20,4], index: 2, kind: input, shape index: {}]
  %s3 = inlined_call_operand.hbm [shape: f32[16,128], index: 3, kind: input, shape index: {}]
  %s4 = inlined_call_operand.hbm [shape: f32[2,8,128], index: 4, kind: output, shape index: {}]
  %s5 = sld [smem:[#allocation0]]
  $region53: #{tpu_custom_call.1} parent=0
    _
  %s7 = ssub.s32 1, %s5
  %s8 = scalar_select 0, %s7, %s5
  $region1: #{tpu_custom_call.1} parent=0
    #allocation2 [shape = 'u8[8192]{0}', space=vmem, size = 0x2000, scoped, tag = 'input window, operand 3, single buffered']
    #allocation3 [shape = 's32[2]{0}', space=sflag, size = 0x8, scoped, tag = 'scoped memory for tpu_custom_call.1']
    #allocation4 [shape = 's32[2]{0}', space=sflag, size = 0x8, scoped, tag = 'scoped memory for tpu_custom_call.1']
    #allocation5 [shape = 'u8[8192]{0}', space=vmem, size = 0x2000, scoped, tag = 'output window, operand 0']
    %9 = vsyncpa [#allocation3], 0
    %10 = vsyncpa [#allocation4], 0
    %s11 = scalar_lea.sflag [#allocation4], 1
    %12 = vsyncpa %s11, 0
    loop: start=0, step=1, limit=4
    $region2: #{tpu_custom_call.1} parent=1 // loop_pre_header
      _
    $region3: #{tpu_custom_call.1} parent=1 // loop_header
      %s14 = sphi 0, %s18
      %p15 = scmp.ge.s32.totalorder %s14, 4
      %s24 = sphi 0, %s26
      %s27 = sphi 0, %s24
      %s28 = sphi 0, %s27
      %s44 = sphi 0, %s28
      %s50 = sphi 0, %s52
      %s53 = sphi 0, %s50
      %s54 = sphi 0, %s53
      %s70 = sphi 0, %s54
      %s74 = sphi 0, %s74
      %s76 = sphi 0, %s74
      %s77 = sphi 0, %s76
      %s91 = sphi 0, %s77
      %s95 = sphi 0, %s95
      %s97 = sphi 0, %s95
      %s98 = sphi 0, %s97
      %s112 = sphi 0, %s98
      %s118 = sphi 0, %s120
      %s121 = sphi 0, %s118
      %s122 = sphi 0, %s121
      %s138 = sphi 0, %s122
    $region4: #{tpu_custom_call.1} parent=1 // loop_header_branch
      %17 = sbr.rel (%p15) target = $region8
    $region5: #{tpu_custom_call.1} parent=1 // loop_body
      %s19 = ssub.s32 %s14, 1
      %s20 = ssub.s32 %s14, 2
      %s21 = sadd.s32 %s14, 1
      %s22 = ssub.s32 %s14, %s21
      %p23 = scmp.eq.s32.totalorder %s22, 0
      %s25 = sadd.s32 %s24, 1
      %s26 = scalar_select %p23, %s24, %s25
      %p29 = pneg %p23
      %p30 = scmp.eq.s32.totalorder %s14, 1
      %p31 = por %p29, %p30
      %p32 = scmp.ne.s32.totalorder %s24, %s27
      %p33 = scmp.eq.s32.totalorder %s14, 0
      %p34 = por %p32, %p33
      %p35 = scmp.ne.s32.totalorder %s24, %s27
      %p36 = scmp.eq.s32.totalorder %s19, 1
      %p37 = por %p35, %p36
      %p38 = scmp.ne.s32.totalorder %s27, %s28
      %p39 = scmp.eq.s32.totalorder %s19, 0
      %p40 = por %p38, %p39
      %p41 = scmp.ne.s32.totalorder %s27, %s28
      %p42 = scmp.eq.s32.totalorder %s20, 1
      %p43 = por %p41, %p42
      %p45 = scmp.ne.s32.totalorder %s28, %s44
      %p46 = scmp.eq.s32.totalorder %s20, 0
      %p47 = por %p45, %p46
      %s48 = ssub.s32 %s14, %s21
      %p49 = scmp.eq.s32.totalorder %s48, 0
      %s51 = sadd.s32 %s50, 1
      %s52 = scalar_select %p49, %s50, %s51
      %p55 = pneg %p49
      %p56 = scmp.eq.s32.totalorder %s14, 1
      %p57 = por %p55, %p56
      %p58 = scmp.ne.s32.totalorder %s50, %s53
      %p59 = scmp.eq.s32.totalorder %s14, 0
      %p60 = por %p58, %p59
      %p61 = scmp.ne.s32.totalorder %s50, %s53
      %p62 = scmp.eq.s32.totalorder %s19, 1
      %p63 = por %p61, %p62
      %p64 = scmp.ne.s32.totalorder %s53, %s54
      %p65 = scmp.eq.s32.totalorder %s19, 0
      %p66 = por %p64, %p65
      %p67 = scmp.ne.s32.totalorder %s53, %s54
      %p68 = scmp.eq.s32.totalorder %s20, 1
      %p69 = por %p67, %p68
      %p71 = scmp.ne.s32.totalorder %s54, %s70
      %p72 = scmp.eq.s32.totalorder %s20, 0
      %p73 = por %p71, %p72
      %s75 = sadd.s32 %s74, 1
      %p78 = scmp.eq.s32.totalorder %s14, 1
      %p79 = scmp.ne.s32.totalorder %s74, %s76
      %p80 = scmp.eq.s32.totalorder %s14, 0
      %p81 = por %p79, %p80
      %p82 = scmp.ne.s32.totalorder %s74, %s76
      %p83 = scmp.eq.s32.totalorder %s19, 1
      %p84 = por %p82, %p83
      %p85 = scmp.ne.s32.totalorder %s76, %s77
      %p86 = scmp.eq.s32.totalorder %s19, 0
      %p87 = por %p85, %p86
      %p88 = scmp.ne.s32.totalorder %s76, %s77
      %p89 = scmp.eq.s32.totalorder %s20, 1
      %p90 = por %p88, %p89
      %p92 = scmp.ne.s32.totalorder %s77, %s91
      %p93 = scmp.eq.s32.totalorder %s20, 0
      %p94 = por %p92, %p93
      %s96 = sadd.s32 %s95, 1
      %p99 = scmp.eq.s32.totalorder %s14, 1
      %p100 = scmp.ne.s32.totalorder %s95, %s97
      %p101 = scmp.eq.s32.totalorder %s14, 0
      %p102 = por %p100, %p101
      %p103 = scmp.ne.s32.totalorder %s95, %s97
      %p104 = scmp.eq.s32.totalorder %s19, 1
      %p105 = por %p103, %p104
      %p106 = scmp.ne.s32.totalorder %s97, %s98
      %p107 = scmp.eq.s32.totalorder %s19, 0
      %p108 = por %p106, %p107
      %p109 = scmp.ne.s32.totalorder %s97, %s98
      %p110 = scmp.eq.s32.totalorder %s20, 1
      %p111 = por %p109, %p110
      %p113 = scmp.ne.s32.totalorder %s98, %s112
      %p114 = scmp.eq.s32.totalorder %s20, 0
      %p115 = por %p113, %p114
      %s116 = ssub.s32 %s14, %s21
      %p117 = scmp.eq.s32.totalorder %s116, 0
      %s119 = sadd.s32 %s118, 1
      %s120 = scalar_select %p117, %s118, %s119
      %p123 = pneg %p117
      %p124 = scmp.eq.s32.totalorder %s14, 1
      %p125 = por %p123, %p124
      %p126 = scmp.ne.s32.totalorder %s118, %s121
      %p127 = scmp.eq.s32.totalorder %s14, 0
      %p128 = por %p126, %p127
      %p129 = scmp.ne.s32.totalorder %s118, %s121
      %p130 = scmp.eq.s32.totalorder %s19, 1
      %p131 = por %p129, %p130
      %p132 = scmp.ne.s32.totalorder %s121, %s122
      %p133 = scmp.eq.s32.totalorder %s19, 0
      %p134 = por %p132, %p133
      %p135 = scmp.ne.s32.totalorder %s121, %s122
      %p136 = scmp.eq.s32.totalorder %s20, 1
      %p137 = por %p135, %p136
      %p139 = scmp.ne.s32.totalorder %s122, %s138
      %p140 = scmp.eq.s32.totalorder %s20, 0
      %p141 = por %p139, %p140
      %p142 = scmp.le.s32.totalorder 1, %s14
      %p143 = scmp.lt.s32.totalorder %s14, 3
      %p144 = pnand %p142, %p143
      %p145 = pneg %p144
      // Predicated region
      $region9: #{tpu_custom_call.1} parent=5 // pred_check
        _
      $region10: #{tpu_custom_call.1} parent=5 // pred_check_branch
        %147 = sbr.rel (%p144) target = $region12
      $region11: #{tpu_custom_call.1} parent=5 // pred_region
        %s148 = ssub.s32 %s14, 1
        // Predicated region
        $region13: #{tpu_custom_call.1} parent=11 // pred_check
          %p149 = pneg %p87
        $region14: #{tpu_custom_call.1} parent=11 // pred_check_branch
          %151 = sbr.rel (%p149) target = $region16
        $region15: #{tpu_custom_call.1} parent=11 // pred_region
          _
        $region16: #{tpu_custom_call.1} parent=11 // pred_fallthru
          _
        // Predicated region
        $region17: #{tpu_custom_call.1} parent=11 // pred_check
          %p152 = pneg %p108
        $region18: #{tpu_custom_call.1} parent=11 // pred_check_branch
          %154 = sbr.rel (%p152) target = $region20
        $region19: #{tpu_custom_call.1} parent=11 // pred_region
          %156 = vsyncadd [#allocation3], 0
          %s157 = sshll.u32 %s3, 4
          %s158 = int_to_ptr.hbm [resolvable:$true] %s157
          %s159 = sshll.u32 [#allocation2], 4
          %s160 = int_to_ptr.vmem [resolvable:$true] %s159
          %165 = dma.hbm_to_vmem [thread:$0]  %s158, 256, %s160, [#allocation3], 128, 128, 8
        $region20: #{tpu_custom_call.1} parent=11 // pred_fallthru
          _
      $region12: #{tpu_custom_call.1} parent=5 // pred_fallthru
        _
      %p166 = scmp.lt.s32.totalorder %s14, 2
      // Predicated region
      $region21: #{tpu_custom_call.1} parent=5 // pred_check
        %p167 = pneg %p166
      $region22: #{tpu_custom_call.1} parent=5 // pred_check_branch
        %169 = sbr.rel (%p167) target = $region24
      $region23: #{tpu_custom_call.1} parent=5 // pred_region
        // Predicated region
        $region25: #{tpu_custom_call.1} parent=23 // pred_check
          %p170 = pneg %p34
        $region26: #{tpu_custom_call.1} parent=23 // pred_check_branch
          %172 = sbr.rel (%p170) target = $region28
        $region27: #{tpu_custom_call.1} parent=23 // pred_region
          %p173 = scmp.lt.s32.totalorder %s14, 1
          %s174 = scalar_select %p173, %s14, 1
          %s175 = smul.addr %s174, 4
          %s176 = scalar_lea.vmem %s0, %s175
        $region28: #{tpu_custom_call.1} parent=23 // pred_fallthru
          _
        // Predicated region
        $region29: #{tpu_custom_call.1} parent=23 // pred_check
          %p177 = pneg %p60
        $region30: #{tpu_custom_call.1} parent=23 // pred_check_branch
          %179 = sbr.rel (%p177) target = $region32
        $region31: #{tpu_custom_call.1} parent=23 // pred_region
          %p180 = scmp.lt.s32.totalorder %s14, 1
          %s181 = scalar_select %p180, %s14, 1
          %s182 = smul.addr %s181, 8
          %s183 = scalar_lea.vmem %s1, %s182
        $region32: #{tpu_custom_call.1} parent=23 // pred_fallthru
          _
      $region24: #{tpu_custom_call.1} parent=5 // pred_fallthru
        _
      %p184 = scmp.le.s32.totalorder 1, %s14
      %p185 = scmp.lt.s32.totalorder %s14, 3
      %p186 = pnand %p184, %p185
      %p187 = pneg %p186
      // Predicated region
      $region33: #{tpu_custom_call.1} parent=5 // pred_check
        _
      $region34: #{tpu_custom_call.1} parent=5 // pred_check_branch
        %189 = sbr.rel (%p186) target = $region36
      $region35: #{tpu_custom_call.1} parent=5 // pred_region
        %s190 = ssub.s32 %s14, 1
        // Predicated region
        $region37: #{tpu_custom_call.1} parent=35 // pred_check
          %p191 = pneg %p108
        $region38: #{tpu_custom_call.1} parent=35 // pred_check_branch
          %193 = sbr.rel (%p191) target = $region40
        $region39: #{tpu_custom_call.1} parent=35 // pred_region
          %195 = dma.done [#allocation3], 256
        $region40: #{tpu_custom_call.1} parent=35 // pred_fallthru
          _
        %p196 = scmp.lt.s32.totalorder %s19, 1
        %s197 = scalar_select %p196, %s19, 1
        %s198 = smul.addr %s197, 4
        %s199 = scalar_lea.vmem %s0, %s198
        %p200 = pneg %p40
        %p201 = pneg %p37
        %p202 = scmp.lt.s32.totalorder %s19, 1
        %s203 = scalar_select %p202, %s19, 1
        %s204 = smul.addr %s203, 8
        %s205 = scalar_lea.vmem %s1, %s204
        %p206 = pneg %p66
        %p207 = pneg %p63
        %p208 = pneg %p87
        %p209 = pneg %p84
        %p210 = pneg %p108
        %p211 = pneg %p105
        %p212 = pneg %p134
        %p213 = pneg %p131
        %s214 = sand.u32 %s121, 1
        %s215 = scalar_lea.sflag [#allocation4], %s214
        %s216 = sand.u32 %s121, 1
        %s217 = smul.addr %s216, 8
        %s218 = scalar_lea.vmem [#allocation5], %s217
        %p219 = scmp.lt.s32.totalorder %s19, 1
        %s220 = scalar_select %p219, %s19, 1
        %s221 = smul.addr %s220, 4
        %s222 = scalar_lea.vmem %s0, %s221
        %p223 = scmp.lt.s32.totalorder %s19, 1
        %s224 = scalar_select %p223, %s19, 1
        %s225 = smul.addr %s224, 8
        %s226 = scalar_lea.vmem %s1, %s225
        %v227 = vld [vmem:[%s2] sm:$0xff]
        %v228 = vld [vmem:[%s2 + $0x8] sm:$0xff]
        %v229 = vld [vmem:[%s2 + $0x10] sm:$0xf]
        %v230 = vld [vmem:[%s222] sm:$0xf]
        %vm231 = vcmask 31744
        %v233 = vsel %vm231, %v227, 0
        %v236 = vsel %vm231, %v228, 0
        %v239 = vsel %vm231, %v229, 0
        %vm241 = vcmask 1043456
        %v243 = vsel %vm241, %v230, 0
        %245 = vmatpush.msra.mxu0 0.0
        %246 = vmatpush.msra.mxu0 0.0
        %247 = vmatpush.msra.mxu0 0.0
        %248 = vmatpush.msra.mxu0 0.0
        %249 = vmatpush.msra.mxu0 0.0
        %250 = vmatpush.msra.mxu0 0.0
        %251 = vmatpush.msra.mxu0 0.0
        %252 = vmatpush.msra.mxu0 0.0
        %253 = vmatpush.msra.mxu0 0.0
        %254 = vmatpush.msra.mxu0 0.0
        %255 = vmatpush.msra.mxu0 0.0
        %256 = vmatpush.msra.mxu0 0.0
        %257 = vmatpush.msra.mxu0 0.0
        %258 = vmatpush.msra.mxu0 0.0
        %259 = vmatpush.msra.mxu0 0.0
        %260 = vmatpush.msra.mxu0 %v243
        %261 = vmatmul.f32.gmra.mxu0 %v233
        %v262 = vpop.f32.mrf.mxu0
        %v263 = vadd.f32 0.0, %v262
        %264 = vmatmul.f32.gmra.mxu0 %v236
        %v265 = vpop.f32.mrf.mxu0
        %v266 = vadd.f32 0.0, %v265
        %267 = vmatmul.f32.gmra.mxu0 %v239
        %v268 = vpop.f32.mrf.mxu0
        %v269 = vadd.f32 0.0, %v268
        %270 = vdwg.mxu0
        %v271 = vld [vmem:[%s226] sm:$0xff]
        %272 = vxpose.xlu0.b32.start [1/16] %v269, 128
        %273 = vxpose.xlu0.b32.cont [2/16] 0.0, 128
        %274 = vxpose.xlu0.b32.cont [3/16] 0.0, 128
        %275 = vxpose.xlu0.b32.cont [4/16] 0.0, 128
        %276 = vxpose.xlu0.b32.cont [5/16] 0.0, 128
        %277 = vxpose.xlu0.b32.cont [6/16] 0.0, 128
        %278 = vxpose.xlu0.b32.cont [7/16] 0.0, 128
        %279 = vxpose.xlu0.b32.cont [8/16] 0.0, 128
        %280 = vxpose.xlu0.b32.cont [9/16] 0.0, 128
        %281 = vxpose.xlu0.b32.cont [10/16] 0.0, 128
        %282 = vxpose.xlu0.b32.cont [11/16] 0.0, 128
        %283 = vxpose.xlu0.b32.cont [12/16] 0.0, 128
        %284 = vxpose.xlu0.b32.cont [13/16] 0.0, 128
        %285 = vxpose.xlu0.b32.cont [14/16] 0.0, 128
        %286 = vxpose.xlu0.b32.cont [15/16] 0.0, 128
        %287 = vxpose.xlu0.b32.end [16/16] 0.0, 128
        %v288 = vpop.trf.xlu0
        %v289 = vpop.trf.xlu0
        %v290 = vpop.trf.xlu0
        %v291 = vpop.trf.xlu0
        %v292 = vpop.trf.xlu0
        %v293 = vpop.trf.xlu0
        %v294 = vpop.trf.xlu0
        %v295 = vpop.trf.xlu0
        %v296 = vpop.trf.xlu0
        %v297 = vpop.trf.xlu0
        %v298 = vpop.trf.xlu0
        %v299 = vpop.trf.xlu0
        %v300 = vpop.trf.xlu0
        %v301 = vpop.trf.xlu0
        %v302 = vpop.trf.xlu0
        %v303 = vpop.trf.xlu0
        %305 = vset.pattern.permute.xlu0 0
        %306 = vperm.xlu0 %305, %v288
        %v307 = vpop.permute.xlu0 %306
        %v309 = vperm.slane %v269, 2
        %v310 = vadd.f32 %v307, %v309
        %vm311 = vcmp.ge.f32.partialorder %v310, 0.0
        %v312 = vmul.f32 %v310, 0.2
        %v313 = vsel %vm311, %v310, %v312
        %vm314 = vcmp.ne.f32.partialorder %v271, 0.0
        %v315 = vmul.f32 %v313, %v271
        %v316 = vsel %vm314, %v315, -9e+15
        %vm317 = vcmask 130048
        %v318 = vsel %vm317, %v316, -inf
        %319 = vmax.xlane.f32.xlu0 %v318
        %v320 = vpop.xlane.xlu0 %319
        %v321 = vsub.f32 %v316, %v320
        %v322 = vmul.f32 %v321, 1.442695
        %v323 = vpow.pop %v322
        %v324 = vsel %vm317, %v323, 0.0
        %325 = vadd.xlane.f32.xlu0 %v324
        %v326 = vpop.xlane.xlu0 %325
        %v327 = vrcp.pop %v326
        %v328 = vmul.f32 %v326, %v327
        %v329 = vsub.f32 2.0, %v328
        %v330 = vmul.f32 %v327, %v329
        %v331 = vmul.f32 %v323, %v330
        %v333 = vsel %vm317, %v331, 0
        %v336 = vsel %vm317, %v263, 0
        %338 = vmatpush.xpose.msra.mxu0 0.0
        %339 = vmatpush.xpose.msra.mxu0 0.0
        %340 = vmatpush.xpose.msra.mxu0 0.0
        %341 = vmatpush.xpose.msra.mxu0 0.0
        %342 = vmatpush.xpose.msra.mxu0 0.0
        %343 = vmatpush.xpose.msra.mxu0 0.0
        %344 = vmatpush.xpose.msra.mxu0 0.0
        %345 = vmatpush.xpose.msra.mxu0 0.0
        %346 = vmatpush.xpose.msra.mxu0 0.0
        %347 = vmatpush.xpose.msra.mxu0 0.0
        %348 = vmatpush.xpose.msra.mxu0 0.0
        %349 = vmatpush.xpose.msra.mxu0 0.0
        %350 = vmatpush.xpose.msra.mxu0 0.0
        %351 = vmatpush.xpose.msra.mxu0 0.0
        %352 = vmatpush.xpose.msra.mxu0 0.0
        %353 = vmatpush.xpose.msra.mxu0 %v336
        %354 = vmatmul.f32.gmra.mxu0 %v333
        %v355 = vpop.f32.mrf.mxu0
        %v356 = vadd.f32 0.0, %v355
        %357 = vdwg.mxu0
        %vm358 = vcmp.gt.f32.partialorder %v356, 0.0
        %v359 = vmul.f32 %v356, 1.442695
        %v360 = vpow.pop %v359
        %v361 = vsub.f32 %v360, 1.0
        %v362 = vsel %vm358, %v356, %v361
        %363 = vset.pattern.permute.xlu0 1
        %364 = vperm.xlu0 %363, %v288
        %v365 = vpop.permute.xlu0 %364
        %v367 = vperm.slane %v269, 3
        %v368 = vadd.f32 %v365, %v367
        %vm369 = vcmp.ge.f32.partialorder %v368, 0.0
        %v370 = vmul.f32 %v368, 0.2
        %v371 = vsel %vm369, %v368, %v370
        %v372 = vmul.f32 %v371, %v271
        %v373 = vsel %vm314, %v372, -9e+15
        %v374 = vsel %vm317, %v373, -inf
        %375 = vmax.xlane.f32.xlu0 %v374
        %v376 = vpop.xlane.xlu0 %375
        %v377 = vsub.f32 %v373, %v376
        %v378 = vmul.f32 %v377, 1.442695
        %v379 = vpow.pop %v378
        %v380 = vsel %vm317, %v379, 0.0
        %381 = vadd.xlane.f32.xlu0 %v380
        %v382 = vpop.xlane.xlu0 %381
        %v383 = vrcp.pop %v382
        %v384 = vmul.f32 %v382, %v383
        %v385 = vsub.f32 2.0, %v384
        %v386 = vmul.f32 %v383, %v385
        %v387 = vmul.f32 %v379, %v386
        %v389 = vsel %vm317, %v387, 0
        %v392 = vsel %vm317, %v266, 0
        %394 = vmatpush.xpose.msra.mxu0 0.0
        %395 = vmatpush.xpose.msra.mxu0 0.0
        %396 = vmatpush.xpose.msra.mxu0 0.0
        %397 = vmatpush.xpose.msra.mxu0 0.0
        %398 = vmatpush.xpose.msra.mxu0 0.0
        %399 = vmatpush.xpose.msra.mxu0 0.0
        %400 = vmatpush.xpose.msra.mxu0 0.0
        %401 = vmatpush.xpose.msra.mxu0 0.0
        %402 = vmatpush.xpose.msra.mxu0 0.0
        %403 = vmatpush.xpose.msra.mxu0 0.0
        %404 = vmatpush.xpose.msra.mxu0 0.0
        %405 = vmatpush.xpose.msra.mxu0 0.0
        %406 = vmatpush.xpose.msra.mxu0 0.0
        %407 = vmatpush.xpose.msra.mxu0 0.0
        %408 = vmatpush.xpose.msra.mxu0 0.0
        %409 = vmatpush.xpose.msra.mxu0 %v392
        %410 = vmatmul.f32.gmra.mxu0 %v389
        %v411 = vpop.f32.mrf.mxu0
        %v412 = vadd.f32 0.0, %v411
        %413 = vdwg.mxu0
        %vm414 = vcmp.gt.f32.partialorder %v412, 0.0
        %v415 = vmul.f32 %v412, 1.442695
        %v416 = vpow.pop %v415
        %v417 = vsub.f32 %v416, 1.0
        %v418 = vsel %vm414, %v412, %v417
        %420 = vrot.lane.b32.xlu0 %v418, 8
        %v421 = vpop.permute.xlu0 %420
        %vm423 = vcmask 64512
        %v424 = vsel %vm423, %v362, %v421
        %v425 = vld [vmem:[#allocation2] sm:$0xff]
        %v426 = vld [vmem:[#allocation2 + $0x8] sm:$0xff]
        %v428 = vsel %vm317, %v424, 0
        %430 = vmatpush.msra.mxu0 0.0
        %431 = vmatpush.msra.mxu0 0.0
        %432 = vmatpush.msra.mxu0 0.0
        %433 = vmatpush.msra.mxu0 0.0
        %434 = vmatpush.msra.mxu0 0.0
        %435 = vmatpush.msra.mxu0 0.0
        %436 = vmatpush.msra.mxu0 0.0
        %437 = vmatpush.msra.mxu0 0.0
        %438 = vmatpush.msra.mxu0 0.0
        %439 = vmatpush.msra.mxu0 0.0
        %440 = vmatpush.msra.mxu0 0.0
        %441 = vmatpush.msra.mxu0 0.0
        %442 = vmatpush.msra.mxu0 0.0
        %443 = vmatpush.msra.mxu0 0.0
        %444 = vmatpush.msra.mxu0 %v426
        %445 = vmatpush.msra.mxu0 %v425
        %446 = vmatmul.f32.gmra.mxu0 %v428
        %v447 = vpop.f32.mrf.mxu0
        %v448 = vadd.f32 0.0, %v447
        %449 = vdwg.mxu0
        %451 = vrot.lane.b32.xlu0 %v448, 125
        %v452 = vpop.permute.xlu0 %451
        %454 = vxpose.xlu0.b32.start [1/16] %v452, 128
        %455 = vxpose.xlu0.b32.cont [2/16] 0.0, 128
        %456 = vxpose.xlu0.b32.cont [3/16] 0.0, 128
        %457 = vxpose.xlu0.b32.cont [4/16] 0.0, 128
        %458 = vxpose.xlu0.b32.cont [5/16] 0.0, 128
        %459 = vxpose.xlu0.b32.cont [6/16] 0.0, 128
        %460 = vxpose.xlu0.b32.cont [7/16] 0.0, 128
        %461 = vxpose.xlu0.b32.cont [8/16] 0.0, 128
        %462 = vxpose.xlu0.b32.cont [9/16] 0.0, 128
        %463 = vxpose.xlu0.b32.cont [10/16] 0.0, 128
        %464 = vxpose.xlu0.b32.cont [11/16] 0.0, 128
        %465 = vxpose.xlu0.b32.cont [12/16] 0.0, 128
        %466 = vxpose.xlu0.b32.cont [13/16] 0.0, 128
        %467 = vxpose.xlu0.b32.cont [14/16] 0.0, 128
        %468 = vxpose.xlu0.b32.cont [15/16] 0.0, 128
        %469 = vxpose.xlu0.b32.end [16/16] 0.0, 128
        %v470 = vpop.trf.xlu0
        %v471 = vpop.trf.xlu0
        %v472 = vpop.trf.xlu0
        %v473 = vpop.trf.xlu0
        %v474 = vpop.trf.xlu0
        %v475 = vpop.trf.xlu0
        %v476 = vpop.trf.xlu0
        %v477 = vpop.trf.xlu0
        %v478 = vpop.trf.xlu0
        %v479 = vpop.trf.xlu0
        %v480 = vpop.trf.xlu0
        %v481 = vpop.trf.xlu0
        %v482 = vpop.trf.xlu0
        %v483 = vpop.trf.xlu0
        %v484 = vpop.trf.xlu0
        %v485 = vpop.trf.xlu0
        %486 = vset.pattern.permute.xlu0 2
        %487 = vperm.xlu0 %486, %v448
        %v488 = vpop.permute.xlu0 %487
        %v490 = vperm.slane %v470, 0
        %v491 = vadd.f32 %v488, %v490
        %vm492 = vcmp.ge.f32.partialorder %v491, 0.0
        %v493 = vmul.f32 %v491, 0.2
        %v494 = vsel %vm492, %v491, %v493
        %v495 = vmul.f32 %v494, %v271
        %v496 = vsel %vm314, %v495, -9e+15
        %v497 = vsel %vm423, %v496, -inf
        %498 = vmax.xlane.f32.xlu0 %v497
        %v499 = vpop.xlane.xlu0 %498
        %v500 = vsub.f32 %v496, %v499
        %v501 = vmul.f32 %v500, 1.442695
        %v502 = vpow.pop %v501
        %v503 = vsel %vm423, %v502, 0.0
        %504 = vadd.xlane.f32.xlu0 %v503
        %v505 = vpop.xlane.xlu0 %504
        %v506 = vrcp.pop %v505
        %v507 = vmul.f32 %v505, %v506
        %v508 = vsub.f32 2.0, %v507
        %v509 = vmul.f32 %v506, %v508
        %v510 = vmul.f32 %v502, %v509
        %v512 = vsel %vm423, %v510, 0
        %514 = vmatpush.msra.mxu0 0.0
        %515 = vmatpush.msra.mxu0 0.0
        %516 = vmatpush.msra.mxu0 0.0
        %517 = vmatpush.msra.mxu0 0.0
        %518 = vmatpush.msra.mxu0 0.0
        %519 = vmatpush.msra.mxu0 0.0
        %520 = vmatpush.msra.mxu0 0.0
        %521 = vmatpush.msra.mxu0 0.0
        %522 = vmatpush.msra.mxu0 0.0
        %523 = vmatpush.msra.mxu0 0.0
        %524 = vmatpush.msra.mxu0 0.0
        %525 = vmatpush.msra.mxu0 0.0
        %526 = vmatpush.msra.mxu0 0.0
        %527 = vmatpush.msra.mxu0 0.0
        %528 = vmatpush.msra.mxu0 0.0
        %529 = vmatpush.msra.mxu0 %v448
        %530 = vmatmul.f32.gmra.mxu0 %v512
        %v531 = vpop.f32.mrf.mxu0
        %v532 = vadd.f32 0.0, %v531
        %533 = vdwg.mxu0
        %vm534 = vcmp.gt.f32.partialorder %v532, 0.0
        %v535 = vmul.f32 %v532, 1.442695
        %v536 = vpow.pop %v535
        %v537 = vsub.f32 %v536, 1.0
        %v538 = vsel %vm534, %v532, %v537
        %539 = vst [vmem:[%s218] sm:$0xff] %v538
        %s540 = sand.u32 %s121, 1
        %s541 = scalar_lea.sflag [#allocation4], %s540
        %s542 = sand.u32 %s121, 1
        %s543 = smul.addr %s542, 8
        %s544 = scalar_lea.vmem [#allocation5], %s543
        // Predicated region
        $region41: #{tpu_custom_call.1} parent=35 // pred_check
          %p545 = pneg %p131
        $region42: #{tpu_custom_call.1} parent=35 // pred_check_branch
          %547 = sbr.rel (%p545) target = $region44
        $region43: #{tpu_custom_call.1} parent=35 // pred_region
          %549 = vsyncadd %s541, 0
          %s550 = smul.addr %s19, 8
          %s551 = scalar_lea.hbm %s4, %s550
          %s553 = sshll.u32 %s544, 4
          %s554 = int_to_ptr.vmem [resolvable:$true] %s553
          %s555 = sshll.u32 %s551, 4
          %s556 = int_to_ptr.hbm [resolvable:$true] %s555
          %558 = dma.vmem_to_hbm [thread:$0]  %s554, 128, %s556, %s541
        $region44: #{tpu_custom_call.1} parent=35 // pred_fallthru
          _
      $region36: #{tpu_custom_call.1} parent=5 // pred_fallthru
        _
      %p559 = scmp.le.s32.totalorder 2, %s14
      // Predicated region
      $region45: #{tpu_custom_call.1} parent=5 // pred_check
        %p560 = pneg %p559
      $region46: #{tpu_custom_call.1} parent=5 // pred_check_branch
        %562 = sbr.rel (%p560) target = $region48
      $region47: #{tpu_custom_call.1} parent=5 // pred_region
        %s563 = ssub.s32 %s14, 2
        // Predicated region
        $region49: #{tpu_custom_call.1} parent=47 // pred_check
          %p564 = pneg %p137
        $region50: #{tpu_custom_call.1} parent=47 // pred_check_branch
          %566 = sbr.rel (%p564) target = $region52
        $region51: #{tpu_custom_call.1} parent=47 // pred_region
          %s567 = sand.u32 %s122, 1
          %s568 = scalar_lea.sflag [#allocation4], %s567
          %s569 = sand.u32 %s122, 1
          %s570 = smul.addr %s569, 8
          %s571 = scalar_lea.vmem [#allocation5], %s570
          %573 = dma.done %s568, 128
        $region52: #{tpu_custom_call.1} parent=47 // pred_fallthru
          _
      $region48: #{tpu_custom_call.1} parent=5 // pred_fallthru
        _
    $region6: #{tpu_custom_call.1} parent=1 // loop_footer
      %s18 = sadd.s32 1, %s14
    $region7: #{tpu_custom_call.1} parent=1 // loop_footer_branch
      %13 = sbr.rel target = $region3
    $region8: #{tpu_custom_call.1} parent=1 // loop_exit
      _
    %574 = vsyncpa [#allocation3], 1
    %s575 = scalar_lea.sflag [#allocation3], 1
    %576 = vsyncpa %s575, 1
    %577 = vsyncpa [#allocation4], 1
    %s578 = scalar_lea.sflag [#allocation4], 1
    %579 = vsyncpa %s578, 1

</llo_original>
